<compile_context>
chip_gen: v6e
topology: v6e:2x2x1
jax: 0.10.0
libtpu: 0.0.40
codegen_flags: <defaults>
</compile_context>

<pallas_src>
import functools

import jax
import jax.numpy as jnp
from jax.experimental import pallas as pl
from jax.experimental.pallas import tpu as pltpu


def _ce2d_kernel(logits_ref, tgt_ref, *rest, ignore_label, num_classes, hw,
                 tile_hw, weighted):
    if weighted:
        w_ref, loss_ref, den_ref = rest
    else:
        loss_ref, den_ref = rest

    # Fresh accumulators at the start of each batch row (pixel-tile axis is the
    # reduction axis; the output block is resident across it).
    @pl.when(pl.program_id(1) == 0)
    def _():
        loss_ref[...] = jnp.zeros_like(loss_ref)
        den_ref[...] = jnp.zeros_like(den_ref)

    logits = logits_ref[...].astype(jnp.float32)            # (C, TP)  classes on sublanes
    tgt = tgt_ref[...]                                       # (1, TP)  int32

    # Lane-index mask for the ragged last tile (avoids padding the logits in HBM).
    col = (jax.lax.broadcasted_iota(jnp.int32, tgt.shape, 1)
           + pl.program_id(1) * tile_hw)                     # (1, TP)
    valid = ((tgt >= 0) & (tgt != ignore_label)
             & (tgt < num_classes) & (col < hw))             # (1, TP) bool

    # Numerically stable log-sum-exp over the class (sublane) axis.
    m = jnp.max(logits, axis=0, keepdims=True)               # (1, TP)
    lse = m + jnp.log(jnp.sum(jnp.exp(logits - m), axis=0, keepdims=True))

    # One-hot select the target-class logit (and optionally its class weight).
    cls = jax.lax.broadcasted_iota(jnp.int32, logits.shape, 0)   # (C, TP)
    onehot = cls == tgt                                          # (C, TP)
    picked = jnp.sum(jnp.where(onehot, logits, 0.0),
                     axis=0, keepdims=True)                      # (1, TP)

    if weighted:
        wvec = w_ref[...].astype(jnp.float32)                    # (C, 1)
        wt = jnp.sum(jnp.where(onehot, wvec, 0.0),
                     axis=0, keepdims=True)                      # (1, TP)
        loss_ref[...] += jnp.where(valid, (lse - picked) * wt, 0.0)
        den_ref[...] += jnp.where(valid, wt, 0.0)
    else:
        loss_ref[...] += jnp.where(valid, lse - picked, 0.0)
        den_ref[...] += valid.astype(jnp.float32)


def cross_entropy_2d(predict, target, weight=None, *, size_average=True,
                     ignore_label=255, tile_hw=2048):
    """predict: (n, c, h, w) float; target: (n, h, w) int. Returns scalar loss."""
    assert predict.ndim == 4 and target.ndim == 3
    n, c, h, w = predict.shape
    assert target.shape == (n, h, w)
    hw = h * w

    # Free reshapes (contiguous, no data movement) — no NCHW->NHWC transpose.
    logits = predict.reshape(n, c, hw)
    tgt = target.reshape(n, 1, hw).astype(jnp.int32)

    # Pixel tile: multiple of 128, capped at the (128-rounded) spatial size.
    tile_hw = max(128, (int(tile_hw) // 128) * 128)
    tile_hw = min(tile_hw, pl.cdiv(hw, 128) * 128)
    num_tiles = pl.cdiv(hw, tile_hw)
    grid = (n, num_tiles)

    weighted = weight is not None
    kernel = functools.partial(
        _ce2d_kernel, ignore_label=int(ignore_label), num_classes=c,
        hw=hw, tile_hw=tile_hw, weighted=weighted)

    in_specs = [
        # logits tile: (C, TILE_HW) — classes on sublanes, pixels on lanes.
        pl.BlockSpec((None, c, tile_hw), lambda b, i: (b, 0, i)),
        # target tile: (1, TILE_HW) — lane-dense int32 labels.
        pl.BlockSpec((None, 1, tile_hw), lambda b, i: (b, 0, i)),
    ]
    args = [logits, tgt]
    if weighted:
        wcol = jnp.asarray(weight, dtype=jnp.float32).reshape(c, 1)
        in_specs.append(pl.BlockSpec((c, 1), lambda b, i: (0, 0)))
        args.append(wcol)

    # Lane-wide per-batch partial accumulators; final reduce happens outside.
    out_shape = (jax.ShapeDtypeStruct((n, 1, tile_hw), jnp.float32),
                 jax.ShapeDtypeStruct((n, 1, tile_hw), jnp.float32))
    out_specs = [pl.BlockSpec((None, 1, tile_hw), lambda b, i: (b, 0, 0)),
                 pl.BlockSpec((None, 1, tile_hw), lambda b, i: (b, 0, 0))]

    loss_part, den_part = pl.pallas_call(
        kernel,
        out_shape=out_shape,
        grid_spec=pltpu.PrefetchScalarGridSpec(
            num_scalar_prefetch=0,
            grid=grid,
            in_specs=in_specs,
            out_specs=out_specs,
        ),
        compiler_params=pltpu.CompilerParams(
            # batch axis "parallel" -> shards across the 2 TCs on v7x;
            # pixel-tile axis is the accumulator axis -> "arbitrary".
            dimension_semantics=("parallel", "arbitrary"),
            vmem_limit_bytes=32 * 1024 * 1024,
        ),
    )(*args)

    s = jnp.sum(loss_part)
    d = jnp.sum(den_part)
    # PyTorch returns zeros(1) when no valid target pixels exist.
    if size_average:
        return jnp.where(d > 0, s / jnp.maximum(d, 1e-12), 0.0)
    return jnp.where(d > 0, s, 0.0)


def _reference(predict, target, weight=None, ignore_label=255):
    n, c, h, w = predict.shape
    logits = jnp.transpose(predict, (0, 2, 3, 1)).reshape(-1, c).astype(jnp.float32)
    tgt = target.reshape(-1)
    valid = (tgt >= 0) & (tgt != ignore_label) & (tgt < c)
    lse = jax.scipy.special.logsumexp(logits, axis=-1)
    picked = jnp.take_along_axis(
        logits, jnp.clip(tgt, 0, c - 1)[:, None], axis=-1)[:, 0]
    if weight is None:
        wt = valid.astype(jnp.float32)
    else:
        wt = jnp.asarray(weight, jnp.float32)[jnp.clip(tgt, 0, c - 1)] * valid
    s = jnp.sum((lse - picked) * wt)
    d = jnp.sum(wt)
    return jnp.where(d > 0, s / jnp.maximum(d, 1e-12), 0.0)


if __name__ == "__main__":
    key = jax.random.PRNGKey(0)
    n, c, h, w = 2, 4, 16, 16
    k1, k2, k3, k4 = jax.random.split(key, 4)

    predict = jax.random.normal(k1, (n, c, h, w), dtype=jnp.float32)
    target = jax.random.randint(k2, (n, h, w), 0, c, dtype=jnp.int32)
    # Sprinkle in some ignored pixels (label 255).
    ignore_mask = jax.random.bernoulli(k3, 0.2, (n, h, w))
    target = jnp.where(ignore_mask, 255, target)

    # Unweighted path.
    loss = cross_entropy_2d(predict, target, weight=None,
                            size_average=True, ignore_label=255)
    jax.block_until_ready(loss)
    ref = _reference(predict, target)
    assert jnp.allclose(loss, ref, rtol=1e-5, atol=1e-5), (loss, ref)

    # Class-weighted path.
    weight = jax.random.uniform(k4, (c,), dtype=jnp.float32,
                                minval=0.5, maxval=2.0)
    loss_w = cross_entropy_2d(predict, target, weight=weight,
                              size_average=True, ignore_label=255)
    jax.block_until_ready(loss_w)
    ref_w = _reference(predict, target, weight=weight)
    assert jnp.allclose(loss_w, ref_w, rtol=1e-5, atol=1e-5), (loss_w, ref_w)

    print("KERNEL_OK")
</pallas_src>

<mosaic_0001>
module attributes {stable_mosaic.version = 11 : i64} {
  func.func @_ce2d_kernel(%arg0: i32, %arg1: i32, %arg2: memref<1x4x256xf32, #tpu.memory_space<vmem>>, %arg3: memref<1x1x256xi32, #tpu.memory_space<vmem>>, %arg4: memref<1x1x256xf32, #tpu.memory_space<vmem>>, %arg5: memref<1x1x256xf32, #tpu.memory_space<vmem>>) attributes {dimension_semantics = [#tpu.dimension_semantics<parallel>, #tpu.dimension_semantics<arbitrary>], iteration_bounds = array<i64: 2, 1>, scalar_prefetch = 0 : i64, scratch_operands = 0 : i64, tpu.core_type = #tpu.core_type<tc>, window_params = [{transform_indices = @transform_0, window_bounds = array<i64: 1, 4, 256>}, {transform_indices = @transform_1, window_bounds = array<i64: 1, 1, 256>}, {transform_indices = @transform_2, window_bounds = array<i64: 1, 1, 256>}, {transform_indices = @transform_3, window_bounds = array<i64: 1, 1, 256>}]} {
    %c0_i32 = arith.constant 0 : i32
    %0 = arith.cmpi eq, %arg1, %c0_i32 : i32
    %1 = arith.extui %0 : i1 to i32
    %c0_i32_0 = arith.constant 0 : i32
    %2 = arith.cmpi ne, %1, %c0_i32_0 : i32
    scf.if %2 {
      %cst_24 = arith.constant 0.000000e+00 : f32
      %55 = vector.broadcast %cst_24 : f32 to vector<1x256xf32>
      %c0_25 = arith.constant 0 : index
      %c0_26 = arith.constant 0 : index
      %c0_27 = arith.constant 0 : index
      %56 = vector.load %arg4[%c0_25, %c0_26, %c0_27] : memref<1x1x256xf32, #tpu.memory_space<vmem>>, vector<1x1x256xf32>
      %57 = vector.shape_cast %56 : vector<1x1x256xf32> to vector<1x256xf32>
      %58 = vector.shape_cast %55 : vector<1x256xf32> to vector<1x1x256xf32>
      tpu.vector_store %arg4[%c0_25, %c0_26, %c0_27], %58 {strides = array<i32>} : memref<1x1x256xf32, #tpu.memory_space<vmem>>, vector<1x1x256xf32>,
      %cst_28 = arith.constant 0.000000e+00 : f32
      %59 = vector.broadcast %cst_28 : f32 to vector<1x256xf32>
      %c0_29 = arith.constant 0 : index
      %c0_30 = arith.constant 0 : index
      %c0_31 = arith.constant 0 : index
      %60 = vector.load %arg5[%c0_29, %c0_30, %c0_31] : memref<1x1x256xf32, #tpu.memory_space<vmem>>, vector<1x1x256xf32>
      %61 = vector.shape_cast %60 : vector<1x1x256xf32> to vector<1x256xf32>
      %62 = vector.shape_cast %59 : vector<1x256xf32> to vector<1x1x256xf32>
      tpu.vector_store %arg5[%c0_29, %c0_30, %c0_31], %62 {strides = array<i32>} : memref<1x1x256xf32, #tpu.memory_space<vmem>>, vector<1x1x256xf32>,
    } else {
    }
    %c0 = arith.constant 0 : index
    %c0_1 = arith.constant 0 : index
    %c0_2 = arith.constant 0 : index
    %3 = vector.load %arg2[%c0, %c0_1, %c0_2] : memref<1x4x256xf32, #tpu.memory_space<vmem>>, vector<1x4x256xf32>
    %4 = vector.shape_cast %3 : vector<1x4x256xf32> to vector<4x256xf32>
    %c0_3 = arith.constant 0 : index
    %c0_4 = arith.constant 0 : index
    %c0_5 = arith.constant 0 : index
    %5 = vector.load %arg3[%c0_3, %c0_4, %c0_5] : memref<1x1x256xi32, #tpu.memory_space<vmem>>, vector<1x1x256xi32>
    %6 = vector.shape_cast %5 : vector<1x1x256xi32> to vector<1x256xi32>
    %7 = tpu.iota {dimensions = array<i32: 1>} : vector<1x256xi32>
    %c256_i32 = arith.constant 256 : i32
    %8 = arith.muli %arg1, %c256_i32 : i32
    %9 = vector.broadcast %8 : i32 to vector<1x256xi32>
    %10 = arith.addi %7, %9 : vector<1x256xi32>
    %c0_i32_6 = arith.constant 0 : i32
    %11 = vector.broadcast %c0_i32_6 : i32 to vector<1x256xi32>
    %12 = arith.cmpi sge, %6, %11 : vector<1x256xi32>
    %c255_i32 = arith.constant 255 : i32
    %13 = vector.broadcast %c255_i32 : i32 to vector<1x256xi32>
    %14 = arith.cmpi ne, %6, %13 : vector<1x256xi32>
    %15 = arith.andi %12, %14 : vector<1x256xi1>
    %c4_i32 = arith.constant 4 : i32
    %16 = vector.broadcast %c4_i32 : i32 to vector<1x256xi32>
    %17 = arith.cmpi slt, %6, %16 : vector<1x256xi32>
    %18 = arith.andi %15, %17 : vector<1x256xi1>
    %c256_i32_7 = arith.constant 256 : i32
    %19 = vector.broadcast %c256_i32_7 : i32 to vector<1x256xi32>
    %20 = arith.cmpi slt, %10, %19 : vector<1x256xi32>
    %21 = arith.andi %18, %20 : vector<1x256xi1>
    %cst = arith.constant dense<0xFF800000> : vector<256xf32>
    %22 = vector.multi_reduction <maximumf>, %4, %cst [0] : vector<4x256xf32> to vector<256xf32>
    %23 = vector.shape_cast %22 : vector<256xf32> to vector<1x256xf32>
    %24 = vector.broadcast %23 : vector<1x256xf32> to vector<4x256xf32>
    %25 = arith.subf %4, %24 : vector<4x256xf32>
    %26 = math.exp %25 : vector<4x256xf32>
    %cst_8 = arith.constant dense<0.000000e+00> : vector<256xf32>
    %27 = vector.multi_reduction <add>, %26, %cst_8 [0] : vector<4x256xf32> to vector<256xf32>
    %28 = vector.shape_cast %27 : vector<256xf32> to vector<1x256xf32>
    %29 = math.log %28 : vector<1x256xf32>
    %30 = arith.addf %23, %29 : vector<1x256xf32>
    %31 = tpu.iota {dimensions = array<i32: 0>} : vector<4x256xi32>
    %32 = vector.broadcast %6 : vector<1x256xi32> to vector<4x256xi32>
    %33 = arith.cmpi eq, %31, %32 : vector<4x256xi32>
    %cst_9 = arith.constant 0.000000e+00 : f32
    %34 = vector.broadcast %cst_9 : f32 to vector<4x256xf32>
    %35 = arith.select %33, %4, %34 : vector<4x256xi1>, vector<4x256xf32>
    %cst_10 = arith.constant dense<0.000000e+00> : vector<256xf32>
    %36 = vector.multi_reduction <add>, %35, %cst_10 [0] : vector<4x256xf32> to vector<256xf32>
    %37 = vector.shape_cast %36 : vector<256xf32> to vector<1x256xf32>
    %c0_11 = arith.constant 0 : index
    %c0_12 = arith.constant 0 : index
    %c0_13 = arith.constant 0 : index
    %38 = vector.load %arg4[%c0_11, %c0_12, %c0_13] : memref<1x1x256xf32, #tpu.memory_space<vmem>>, vector<1x1x256xf32>
    %39 = vector.shape_cast %38 : vector<1x1x256xf32> to vector<1x256xf32>
    %40 = arith.subf %30, %37 : vector<1x256xf32>
    %cst_14 = arith.constant 0.000000e+00 : f32
    %41 = vector.broadcast %cst_14 : f32 to vector<1x256xf32>
    %42 = arith.select %21, %40, %41 : vector<1x256xi1>, vector<1x256xf32>
    %43 = arith.addf %39, %42 : vector<1x256xf32>
    %c0_15 = arith.constant 0 : index
    %c0_16 = arith.constant 0 : index
    %c0_17 = arith.constant 0 : index
    %44 = vector.load %arg4[%c0_15, %c0_16, %c0_17] : memref<1x1x256xf32, #tpu.memory_space<vmem>>, vector<1x1x256xf32>
    %45 = vector.shape_cast %44 : vector<1x1x256xf32> to vector<1x256xf32>
    %46 = vector.shape_cast %43 : vector<1x256xf32> to vector<1x1x256xf32>
    tpu.vector_store %arg4[%c0_15, %c0_16, %c0_17], %46 {strides = array<i32>} : memref<1x1x256xf32, #tpu.memory_space<vmem>>, vector<1x1x256xf32>,
    %c0_18 = arith.constant 0 : index
    %c0_19 = arith.constant 0 : index
    %c0_20 = arith.constant 0 : index
    %47 = vector.load %arg5[%c0_18, %c0_19, %c0_20] : memref<1x1x256xf32, #tpu.memory_space<vmem>>, vector<1x1x256xf32>
    %48 = vector.shape_cast %47 : vector<1x1x256xf32> to vector<1x256xf32>
    %49 = arith.extui %21 : vector<1x256xi1> to vector<1x256xi32>
    %50 = arith.sitofp %49 : vector<1x256xi32> to vector<1x256xf32>
    %51 = arith.addf %48, %50 : vector<1x256xf32>
    %c0_21 = arith.constant 0 : index
    %c0_22 = arith.constant 0 : index
    %c0_23 = arith.constant 0 : index
    %52 = vector.load %arg5[%c0_21, %c0_22, %c0_23] : memref<1x1x256xf32, #tpu.memory_space<vmem>>, vector<1x1x256xf32>
    %53 = vector.shape_cast %52 : vector<1x1x256xf32> to vector<1x256xf32>
    %54 = vector.shape_cast %51 : vector<1x256xf32> to vector<1x1x256xf32>
    tpu.vector_store %arg5[%c0_21, %c0_22, %c0_23], %54 {strides = array<i32>} : memref<1x1x256xf32, #tpu.memory_space<vmem>>, vector<1x1x256xf32>,
    return
  }
  func.func @transform_0(%arg0: i32, %arg1: i32) -> (i32, i32, i32) {
    %c0_i32 = arith.constant 0 : i32
    %c0_i32_0 = arith.constant 0 : i32
    return %arg0, %c0_i32, %arg1 : i32, i32, i32
  }
  func.func @transform_1(%arg0: i32, %arg1: i32) -> (i32, i32, i32) {
    %c0_i32 = arith.constant 0 : i32
    %c0_i32_0 = arith.constant 0 : i32
    return %arg0, %c0_i32, %arg1 : i32, i32, i32
  }
  func.func @transform_2(%arg0: i32, %arg1: i32) -> (i32, i32, i32) {
    %c0_i32 = arith.constant 0 : i32
    %c0_i32_0 = arith.constant 0 : i32
    %c0_i32_1 = arith.constant 0 : i32
    return %arg0, %c0_i32, %c0_i32_0 : i32, i32, i32
  }
  func.func @transform_3(%arg0: i32, %arg1: i32) -> (i32, i32, i32) {
    %c0_i32 = arith.constant 0 : i32
    %c0_i32_0 = arith.constant 0 : i32
    %c0_i32_1 = arith.constant 0 : i32
    return %arg0, %c0_i32, %c0_i32_0 : i32, i32, i32
  }
}

</mosaic_0001>

<llo_original>
// kernel: tpu_custom_call.1
$region0: #{tpu_custom_call.1}
  #allocation0 [shape = 'u32[]', space=smem, size = 0x4, offset = 0x4, fixed_abs, tag = 'smem constant byte address 0x4 - core index']
  #allocation1 [shape = 'u32[144,128]{1,0:T(1,128)}', space=vmem, size = 0x12000, scoped, tag = 'internal scratch']
  %s0 = inlined_call_operand.hbm [shape: f32[2,4,256], index: 0, kind: input, shape index: {}]
  %s1 = inlined_call_operand.hbm [shape: s32[2,1,256], index: 1, kind: input, shape index: {}]
  %s2 = inlined_call_operand.hbm [shape: f32[2,1,256], index: 2, kind: output, shape index: {0}]
  %s3 = inlined_call_operand.hbm [shape: f32[2,1,256], index: 3, kind: output, shape index: {1}]
  %4 = xla_tuple %s2, %s3
  %s5 = sld [smem:[#allocation0]]
  $region61: #{tpu_custom_call.1} parent=0
    _
  %s7 = ssub.s32 1, %s5
  %s8 = scalar_select 0, %s7, %s5
  $region1: #{tpu_custom_call.1} parent=0
    #allocation2 [shape = 'u8[8192]{0}', space=vmem, size = 0x2000, scoped, tag = 'input window, operand 0']
    #allocation3 [shape = 's32[2]{0}', space=sflag, size = 0x8, scoped, tag = 'scoped memory for tpu_custom_call.1']
    #allocation4 [shape = 's32[2]{0}', space=sflag, size = 0x8, scoped, tag = 'scoped memory for tpu_custom_call.1']
    #allocation5 [shape = 'u8[2048]{0}', space=vmem, size = 0x800, scoped, tag = 'input window, operand 1']
    #allocation6 [shape = 's32[2]{0}', space=sflag, size = 0x8, scoped, tag = 'scoped memory for tpu_custom_call.1']
    #allocation7 [shape = 'u8[2048]{0}', space=vmem, size = 0x800, scoped, tag = 'output window, operand 0']
    #allocation8 [shape = 'u8[2048]{0}', space=vmem, size = 0x800, scoped, tag = 'output window, operand 1']
    #allocation9 [shape = 's32[2]{0}', space=sflag, size = 0x8, scoped, tag = 'scoped memory for tpu_custom_call.1']
    %9 = vsyncpa [#allocation3], 0
    %s10 = scalar_lea.sflag [#allocation3], 1
    %11 = vsyncpa %s10, 0
    %12 = vsyncpa [#allocation6], 0
    %s13 = scalar_lea.sflag [#allocation6], 1
    %14 = vsyncpa %s13, 0
    %15 = vsyncpa [#allocation4], 0
    %s16 = scalar_lea.sflag [#allocation4], 1
    %17 = vsyncpa %s16, 0
    %18 = vsyncpa [#allocation9], 0
    %s19 = scalar_lea.sflag [#allocation9], 1
    %20 = vsyncpa %s19, 0
    loop: start=0, step=1, limit=4
    $region2: #{tpu_custom_call.1} parent=1 // loop_pre_header
      _
    $region3: #{tpu_custom_call.1} parent=1 // loop_header
      %s22 = sphi 0, %s26
      %p23 = scmp.ge.s32.totalorder %s22, 4
      %s29 = sphi 0, %s41
      %s30 = sphi 0, %s37
      %s31 = sphi 0, %s29
      %s32 = sphi 0, %s30
      %s33 = sphi 0, %s31
      %s34 = sphi 0, %s32
      %s46 = sphi 0, %s48
      %s49 = sphi 0, %s46
      %s50 = sphi 0, %s49
      %s66 = sphi 0, %s50
      %s74 = sphi 0, %s76
      %s77 = sphi 0, %s74
      %s78 = sphi 0, %s77
      %s94 = sphi 0, %s78
      %s100 = sphi 0, %s102
      %s103 = sphi 0, %s100
      %s104 = sphi 0, %s103
      %s120 = sphi 0, %s104
      %s126 = sphi 0, %s128
      %s129 = sphi 0, %s126
      %s130 = sphi 0, %s129
      %s146 = sphi 0, %s130
    $region4: #{tpu_custom_call.1} parent=1 // loop_header_branch
      %25 = sbr.rel (%p23) target = $region8
    $region5: #{tpu_custom_call.1} parent=1 // loop_body
      %s27 = ssub.s32 %s22, 1
      %s28 = ssub.s32 %s22, 2
      %s35 = sadd.s32 1, %s30
      %p36 = scmp.ge.s32.totalorder %s35, 1
      %s37 = scalar_select %p36, 0, %s35
      %s38 = sadd.s32 1, %s29
      %s39 = scalar_select %p36, %s38, %s29
      %p40 = scmp.ge.s32.totalorder %s39, 2
      %s41 = scalar_select %p40, 0, %s39
      %s42 = ssub.s32 %s29, %s41
      %s43 = ssub.s32 %s30, %s37
      %s44 = sor.u32 %s42, %s43
      %p45 = scmp.eq.s32.totalorder %s44, 0
      %s47 = sadd.s32 %s46, 1
      %s48 = scalar_select %p45, %s46, %s47
      %p51 = pneg %p45
      %p52 = scmp.eq.s32.totalorder %s22, 1
      %p53 = por %p51, %p52
      %p54 = scmp.ne.s32.totalorder %s46, %s49
      %p55 = scmp.eq.s32.totalorder %s22, 0
      %p56 = por %p54, %p55
      %p57 = scmp.ne.s32.totalorder %s46, %s49
      %p58 = scmp.eq.s32.totalorder %s27, 1
      %p59 = por %p57, %p58
      %p60 = scmp.ne.s32.totalorder %s49, %s50
      %p61 = scmp.eq.s32.totalorder %s27, 0
      %p62 = por %p60, %p61
      %p63 = scmp.ne.s32.totalorder %s49, %s50
      %p64 = scmp.eq.s32.totalorder %s28, 1
      %p65 = por %p63, %p64
      %p67 = scmp.ne.s32.totalorder %s50, %s66
      %p68 = scmp.eq.s32.totalorder %s28, 0
      %p69 = por %p67, %p68
      %s70 = ssub.s32 %s29, %s41
      %s71 = ssub.s32 %s30, %s37
      %s72 = sor.u32 %s70, %s71
      %p73 = scmp.eq.s32.totalorder %s72, 0
      %s75 = sadd.s32 %s74, 1
      %s76 = scalar_select %p73, %s74, %s75
      %p79 = pneg %p73
      %p80 = scmp.eq.s32.totalorder %s22, 1
      %p81 = por %p79, %p80
      %p82 = scmp.ne.s32.totalorder %s74, %s77
      %p83 = scmp.eq.s32.totalorder %s22, 0
      %p84 = por %p82, %p83
      %p85 = scmp.ne.s32.totalorder %s74, %s77
      %p86 = scmp.eq.s32.totalorder %s27, 1
      %p87 = por %p85, %p86
      %p88 = scmp.ne.s32.totalorder %s77, %s78
      %p89 = scmp.eq.s32.totalorder %s27, 0
      %p90 = por %p88, %p89
      %p91 = scmp.ne.s32.totalorder %s77, %s78
      %p92 = scmp.eq.s32.totalorder %s28, 1
      %p93 = por %p91, %p92
      %p95 = scmp.ne.s32.totalorder %s78, %s94
      %p96 = scmp.eq.s32.totalorder %s28, 0
      %p97 = por %p95, %p96
      %s98 = ssub.s32 %s29, %s41
      %p99 = scmp.eq.s32.totalorder %s98, 0
      %s101 = sadd.s32 %s100, 1
      %s102 = scalar_select %p99, %s100, %s101
      %p105 = pneg %p99
      %p106 = scmp.eq.s32.totalorder %s22, 1
      %p107 = por %p105, %p106
      %p108 = scmp.ne.s32.totalorder %s100, %s103
      %p109 = scmp.eq.s32.totalorder %s22, 0
      %p110 = por %p108, %p109
      %p111 = scmp.ne.s32.totalorder %s100, %s103
      %p112 = scmp.eq.s32.totalorder %s27, 1
      %p113 = por %p111, %p112
      %p114 = scmp.ne.s32.totalorder %s103, %s104
      %p115 = scmp.eq.s32.totalorder %s27, 0
      %p116 = por %p114, %p115
      %p117 = scmp.ne.s32.totalorder %s103, %s104
      %p118 = scmp.eq.s32.totalorder %s28, 1
      %p119 = por %p117, %p118
      %p121 = scmp.ne.s32.totalorder %s104, %s120
      %p122 = scmp.eq.s32.totalorder %s28, 0
      %p123 = por %p121, %p122
      %s124 = ssub.s32 %s29, %s41
      %p125 = scmp.eq.s32.totalorder %s124, 0
      %s127 = sadd.s32 %s126, 1
      %s128 = scalar_select %p125, %s126, %s127
      %p131 = pneg %p125
      %p132 = scmp.eq.s32.totalorder %s22, 1
      %p133 = por %p131, %p132
      %p134 = scmp.ne.s32.totalorder %s126, %s129
      %p135 = scmp.eq.s32.totalorder %s22, 0
      %p136 = por %p134, %p135
      %p137 = scmp.ne.s32.totalorder %s126, %s129
      %p138 = scmp.eq.s32.totalorder %s27, 1
      %p139 = por %p137, %p138
      %p140 = scmp.ne.s32.totalorder %s129, %s130
      %p141 = scmp.eq.s32.totalorder %s27, 0
      %p142 = por %p140, %p141
      %p143 = scmp.ne.s32.totalorder %s129, %s130
      %p144 = scmp.eq.s32.totalorder %s28, 1
      %p145 = por %p143, %p144
      %p147 = scmp.ne.s32.totalorder %s130, %s146
      %p148 = scmp.eq.s32.totalorder %s28, 0
      %p149 = por %p147, %p148
      %p150 = scmp.le.s32.totalorder 1, %s22
      %p151 = scmp.lt.s32.totalorder %s22, 3
      %p152 = pnand %p150, %p151
      %p153 = pneg %p152
      // Predicated region
      $region9: #{tpu_custom_call.1} parent=5 // pred_check
        _
      $region10: #{tpu_custom_call.1} parent=5 // pred_check_branch
        %155 = sbr.rel (%p152) target = $region12
      $region11: #{tpu_custom_call.1} parent=5 // pred_region
        %s156 = ssub.s32 %s22, 1
      $region12: #{tpu_custom_call.1} parent=5 // pred_fallthru
        _
      %p157 = scmp.lt.s32.totalorder %s22, 2
      // Predicated region
      $region13: #{tpu_custom_call.1} parent=5 // pred_check
        %p158 = pneg %p157
      $region14: #{tpu_custom_call.1} parent=5 // pred_check_branch
        %160 = sbr.rel (%p158) target = $region16
      $region15: #{tpu_custom_call.1} parent=5 // pred_region
        // Predicated region
        $region17: #{tpu_custom_call.1} parent=15 // pred_check
          %p161 = pneg %p56
        $region18: #{tpu_custom_call.1} parent=15 // pred_check_branch
          %163 = sbr.rel (%p161) target = $region20
        $region19: #{tpu_custom_call.1} parent=15 // pred_region
          %s164 = sand.u32 %s46, 1
          %s165 = scalar_lea.sflag [#allocation3], %s164
          %s166 = sand.u32 %s46, 1
          %s167 = smul.addr %s166, 8
          %s168 = scalar_lea.vmem [#allocation2], %s167
          %s169 = smul.u32 2, %s30
          %s171 = ssub.s32 128, 128
          %172 = vsyncadd %s165, %s171
          %s173 = smul.addr %s29, 2
          %s174 = sadd.s32 %s169, %s173
          %s175 = smul.addr %s174, 64
          %s176 = scalar_lea.hbm %s0, %s175
          %s178 = sshll.u32 %s168, 4
          %s179 = int_to_ptr.vmem [resolvable:$true] %s178
          %181 = dma.hbm_to_vmem [thread:$0]  %s176, 128, %s179, %s165
        $region20: #{tpu_custom_call.1} parent=15 // pred_fallthru
          _
        // Predicated region
        $region21: #{tpu_custom_call.1} parent=15 // pred_check
          %p182 = pneg %p84
        $region22: #{tpu_custom_call.1} parent=15 // pred_check_branch
          %184 = sbr.rel (%p182) target = $region24
        $region23: #{tpu_custom_call.1} parent=15 // pred_region
          %s185 = sand.u32 %s74, 1
          %s186 = scalar_lea.sflag [#allocation6], %s185
          %s187 = sand.u32 %s74, 1
          %s188 = smul.addr %s187, 2
          %s189 = scalar_lea.vmem [#allocation5], %s188
          %s190 = smul.u32 2, %s30
          %s192 = ssub.s32 32, 32
          %193 = vsyncadd %s186, %s192
          %s194 = smul.addr %s29, 2
          %s195 = sadd.s32 %s190, %s194
          %s196 = smul.addr %s195, 16
          %s197 = scalar_lea.hbm %s1, %s196
          %s199 = sshll.u32 %s189, 4
          %s200 = int_to_ptr.vmem [resolvable:$true] %s199
          %202 = dma.hbm_to_vmem [thread:$0]  %s197, 32, %s200, %s186
        $region24: #{tpu_custom_call.1} parent=15 // pred_fallthru
          _
      $region16: #{tpu_custom_call.1} parent=5 // pred_fallthru
        _
      %p203 = scmp.le.s32.totalorder 1, %s22
      %p204 = scmp.lt.s32.totalorder %s22, 3
      %p205 = pnand %p203, %p204
      %p206 = pneg %p205
      // Predicated region
      $region25: #{tpu_custom_call.1} parent=5 // pred_check
        _
      $region26: #{tpu_custom_call.1} parent=5 // pred_check_branch
        %208 = sbr.rel (%p205) target = $region28
      $region27: #{tpu_custom_call.1} parent=5 // pred_region
        %s209 = ssub.s32 %s22, 1
        %s210 = sand.u32 %s49, 1
        %s211 = scalar_lea.sflag [#allocation3], %s210
        %s212 = sand.u32 %s49, 1
        %s213 = smul.addr %s212, 8
        %s214 = scalar_lea.vmem [#allocation2], %s213
        // Predicated region
        $region29: #{tpu_custom_call.1} parent=27 // pred_check
          %p215 = pneg %p62
        $region30: #{tpu_custom_call.1} parent=27 // pred_check_branch
          %217 = sbr.rel (%p215) target = $region32
        $region31: #{tpu_custom_call.1} parent=27 // pred_region
          %218 = dma.done %s211, 128
        $region32: #{tpu_custom_call.1} parent=27 // pred_fallthru
          _
        %s219 = sand.u32 %s77, 1
        %s220 = scalar_lea.sflag [#allocation6], %s219
        %s221 = sand.u32 %s77, 1
        %s222 = smul.addr %s221, 2
        %s223 = scalar_lea.vmem [#allocation5], %s222
        // Predicated region
        $region33: #{tpu_custom_call.1} parent=27 // pred_check
          %p224 = pneg %p90
        $region34: #{tpu_custom_call.1} parent=27 // pred_check_branch
          %226 = sbr.rel (%p224) target = $region36
        $region35: #{tpu_custom_call.1} parent=27 // pred_region
          %227 = dma.done %s220, 32
        $region36: #{tpu_custom_call.1} parent=27 // pred_fallthru
          _
        %s228 = sand.u32 %s49, 1
        %s229 = scalar_lea.sflag [#allocation3], %s228
        %s230 = sand.u32 %s49, 1
        %s231 = smul.addr %s230, 8
        %s232 = scalar_lea.vmem [#allocation2], %s231
        %p233 = pneg %p62
        %p234 = pneg %p59
        %s235 = sand.u32 %s77, 1
        %s236 = scalar_lea.sflag [#allocation6], %s235
        %s237 = sand.u32 %s77, 1
        %s238 = smul.addr %s237, 2
        %s239 = scalar_lea.vmem [#allocation5], %s238
        %p240 = pneg %p90
        %p241 = pneg %p87
        %p242 = pneg %p116
        %p243 = pneg %p113
        %s244 = sand.u32 %s103, 1
        %s245 = scalar_lea.sflag [#allocation4], %s244
        %s246 = sand.u32 %s103, 1
        %s247 = smul.addr %s246, 2
        %s248 = scalar_lea.vmem [#allocation7], %s247
        %p249 = pneg %p142
        %p250 = pneg %p139
        %s251 = sand.u32 %s129, 1
        %s252 = scalar_lea.sflag [#allocation9], %s251
        %s253 = sand.u32 %s129, 1
        %s254 = smul.addr %s253, 2
        %s255 = scalar_lea.vmem [#allocation8], %s254
        %s256 = smul.u32 2, %s32
        %s257 = smul.u32 2, %s32
        %p258 = scmp.eq.s32.totalorder %s32, 0
        // Predicated region
        $region37: #{tpu_custom_call.1} parent=27 // pred_check
          %p259 = pneg %p258
        $region38: #{tpu_custom_call.1} parent=27 // pred_check_branch
          %261 = sbr.rel (%p259) target = $region40
        $region39: #{tpu_custom_call.1} parent=27 // pred_region
          %v262 = vlaneseq
          %vm263 = vcmp.ge.s32.totalorder %v262, 0
          %vm264 = vcmp.lt.s32.totalorder %v262, 256
          %vm265 = vmand %vm263, %vm264
          %266 = vst.msk [vmem:[%s248] sm:$0x3] %vm265, 0.0
          %267 = vst.msk [vmem:[%s255] sm:$0x3] %vm265, 0.0
        $region40: #{tpu_custom_call.1} parent=27 // pred_fallthru
          _
        %v268 = vld [vmem:[%s214] sm:$0xff]
        %v269 = vld [vmem:[%s223] sm:$0x3]
        %v270 = vlaneseq
        %v271 = vand.u32 %v270, 127
        %v272 = vadd.s32 %v271, 128
        %s273 = smul.u32 %s32, 256
        %v274 = vstv %s273
        %v275 = vadd.s32 %v271, %v274
        %v276 = vadd.s32 %v272, %v274
        %vm277 = vcmp.ge.s32.totalorder %v269, 0
        %vm278 = vcmp.ne.s32.totalorder %v269, 255
        %vm279 = vmand %vm277, %vm278
        %vm280 = vcmp.lt.s32.totalorder %v269, 4
        %vm281 = vmand %vm279, %vm280
        %vm282 = vcmp.lt.s32.totalorder %v275, 256
        %vm283 = vcmp.lt.s32.totalorder %v276, 256
        %v284 = vsel %vm282, 1, 0
        %v285 = vsel %vm283, 1, 0
        %v286 = vcombine.low %v284, %v285
        %v288 = vunpack.c.l.s4 1966171168
        %v289 = vunpack.c.0.s8 %v288
        %v290 = vlaneseq
        %v291 = vshrl.u32 %v290, 7
        %v292 = vsub.s32 %v289, %v291
        %v293 = vrot.slane %v286, %v292
        %v295 = vunpack.c.l.s4 1966171168
        %v296 = vunpack.c.0.s8 %v295
        %v297 = vlaneseq
        %v298 = vshrl.u32 %v297, 7
        %v299 = vsub.s32 %v296, %v298
        %v300 = vrot.slane %v293, %v299
        %vm301 = vcmp.ne.s32.totalorder %v300, 0
        %vm302 = vmand %vm281, %vm301
        %v304 = vcombine.high %v268, %v268
        %vm306 = vcmask 1043456
        %v307 = vsel %vm306, %v268, -inf
        %v308 = vrot.slane %v307, 4
        %v309 = vmax.f32 %v307, %v308
        %v310 = vrot.slane %v309, 2
        %v311 = vmax.f32 %v309, %v310
        %v312 = vrot.slane %v311, 1
        %v313 = vmax.f32 %v311, %v312
        %v314 = vsel %vm306, %v304, -inf
        %v315 = vrot.slane %v314, 4
        %v316 = vmax.f32 %v314, %v315
        %v317 = vrot.slane %v316, 2
        %v318 = vmax.f32 %v316, %v317
        %v319 = vrot.slane %v318, 1
        %v320 = vmax.f32 %v318, %v319
        %v323 = vcombine.low %v313, %v320
        %v325 = vsub.f32 %v268, %v323
        %v326 = vmul.f32 %v325, 1.442695
        %v327 = vpow.pop %v326
        %v329 = vcombine.high %v327, %v327
        %v331 = vsel %vm306, %v327, 0.0
        %v332 = vrot.slane %v331, 4
        %v333 = vadd.f32 %v331, %v332
        %v334 = vrot.slane %v333, 2
        %v335 = vadd.f32 %v333, %v334
        %v336 = vrot.slane %v335, 1
        %v337 = vadd.f32 %v335, %v336
        %v338 = vsel %vm306, %v329, 0.0
        %v339 = vrot.slane %v338, 4
        %v340 = vadd.f32 %v338, %v339
        %v341 = vrot.slane %v340, 2
        %v342 = vadd.f32 %v340, %v341
        %v343 = vrot.slane %v342, 1
        %v344 = vadd.f32 %v342, %v343
        %v345 = vlog2.pop %v337
        %v346 = vmul.f32 %v345, 0.6931472
        %v347 = vlog2.pop %v344
        %v348 = vmul.f32 %v347, 0.6931472
        %v349 = vadd.f32 %v313, %v346
        %v350 = vadd.f32 %v320, %v348
        %v351 = vlaneseq
        %v352 = vshrl.u32 %v351, 7
        %v353 = vlaneseq
        %v354 = vshrl.u32 %v353, 7
        %v355 = vsub.s32 0, %v354
        %v356 = vrot.slane %v269, %v355
        %v357 = vlaneseq
        %v358 = vshrl.u32 %v357, 7
        %v359 = vsub.s32 1, %v358
        %v360 = vrot.slane %v269, %v359
        %vm361 = vcmp.eq.s32.totalorder %v352, %v356
        %vm362 = vcmp.eq.s32.totalorder %v352, %v360
        %v363 = vsel %vm361, %v268, 0.0
        %v364 = vsel %vm362, %v304, 0.0
        %v365 = vsel %vm306, %v363, 0.0
        %v366 = vrot.slane %v365, 4
        %v367 = vadd.f32 %v365, %v366
        %v368 = vrot.slane %v367, 2
        %v369 = vadd.f32 %v367, %v368
        %v370 = vrot.slane %v369, 1
        %v371 = vadd.f32 %v369, %v370
        %v372 = vsel %vm306, %v364, 0.0
        %v373 = vrot.slane %v372, 4
        %v374 = vadd.f32 %v372, %v373
        %v375 = vrot.slane %v374, 2
        %v376 = vadd.f32 %v374, %v375
        %v377 = vrot.slane %v376, 1
        %v378 = vadd.f32 %v376, %v377
        %v379 = vld [vmem:[%s248] sm:$0x3]
        %v380 = vsub.f32 %v349, %v371
        %v381 = vsub.f32 %v350, %v378
        %v384 = vcombine.low %v380, %v381
        %v386 = vunpack.c.l.s4 1966171168
        %v387 = vunpack.c.0.s8 %v386
        %v388 = vlaneseq
        %v389 = vshrl.u32 %v388, 7
        %v390 = vsub.s32 %v387, %v389
        %v391 = vrot.slane %v384, %v390
        %v393 = vunpack.c.l.s4 1966171168
        %v394 = vunpack.c.0.s8 %v393
        %v395 = vlaneseq
        %v396 = vshrl.u32 %v395, 7
        %v397 = vsub.s32 %v394, %v396
        %v398 = vrot.slane %v391, %v397
        %v400 = vsel %vm302, %v398, 0.0
        %v401 = vadd.f32 %v379, %v400
        %v402 = vlaneseq
        %vm403 = vcmp.ge.s32.totalorder %v402, 0
        %vm404 = vcmp.lt.s32.totalorder %v402, 256
        %vm405 = vmand %vm403, %vm404
        %406 = vst.msk [vmem:[%s248] sm:$0x3] %vm405, %v401
        %v407 = vld [vmem:[%s255] sm:$0x3]
        %v408 = vsel %vm302, 1, 0
        %v409 = vcvt.s32.f32 %v408
        %v410 = vadd.f32 %v407, %v409
        %411 = vst.msk [vmem:[%s255] sm:$0x3] %vm405, %v410
        %s412 = sand.u32 %s103, 1
        %s413 = scalar_lea.sflag [#allocation4], %s412
        %s414 = sand.u32 %s103, 1
        %s415 = smul.addr %s414, 2
        %s416 = scalar_lea.vmem [#allocation7], %s415
        %s417 = sand.u32 %s129, 1
        %s418 = scalar_lea.sflag [#allocation9], %s417
        %s419 = sand.u32 %s129, 1
        %s420 = smul.addr %s419, 2
        %s421 = scalar_lea.vmem [#allocation8], %s420
        // Predicated region
        $region41: #{tpu_custom_call.1} parent=27 // pred_check
          %p422 = pneg %p113
        $region42: #{tpu_custom_call.1} parent=27 // pred_check_branch
          %424 = sbr.rel (%p422) target = $region44
        $region43: #{tpu_custom_call.1} parent=27 // pred_region
          %s426 = ssub.s32 32, 32
          %427 = vsyncadd %s413, %s426
          %s428 = smul.addr %s31, 2
          %s429 = smul.addr %s428, 16
          %s430 = scalar_lea.hbm %s2, %s429
          %s432 = sshll.u32 %s416, 4
          %s433 = int_to_ptr.vmem [resolvable:$true] %s432
          %435 = dma.vmem_to_hbm [thread:$0]  %s433, 32, %s430, %s413
        $region44: #{tpu_custom_call.1} parent=27 // pred_fallthru
          _
        // Predicated region
        $region45: #{tpu_custom_call.1} parent=27 // pred_check
          %p436 = pneg %p139
        $region46: #{tpu_custom_call.1} parent=27 // pred_check_branch
          %438 = sbr.rel (%p436) target = $region48
        $region47: #{tpu_custom_call.1} parent=27 // pred_region
          %s440 = ssub.s32 32, 32
          %441 = vsyncadd %s418, %s440
          %s442 = smul.addr %s31, 2
          %s443 = smul.addr %s442, 16
          %s444 = scalar_lea.hbm %s3, %s443
          %s446 = sshll.u32 %s421, 4
          %s447 = int_to_ptr.vmem [resolvable:$true] %s446
          %449 = dma.vmem_to_hbm [thread:$0]  %s447, 32, %s444, %s418
        $region48: #{tpu_custom_call.1} parent=27 // pred_fallthru
          _
      $region28: #{tpu_custom_call.1} parent=5 // pred_fallthru
        _
      %p450 = scmp.le.s32.totalorder 2, %s22
      // Predicated region
      $region49: #{tpu_custom_call.1} parent=5 // pred_check
        %p451 = pneg %p450
      $region50: #{tpu_custom_call.1} parent=5 // pred_check_branch
        %453 = sbr.rel (%p451) target = $region52
      $region51: #{tpu_custom_call.1} parent=5 // pred_region
        %s454 = ssub.s32 %s22, 2
        // Predicated region
        $region53: #{tpu_custom_call.1} parent=51 // pred_check
          %p455 = pneg %p119
        $region54: #{tpu_custom_call.1} parent=51 // pred_check_branch
          %457 = sbr.rel (%p455) target = $region56
        $region55: #{tpu_custom_call.1} parent=51 // pred_region
          %s458 = sand.u32 %s104, 1
          %s459 = scalar_lea.sflag [#allocation4], %s458
          %s460 = sand.u32 %s104, 1
          %s461 = smul.addr %s460, 2
          %s462 = scalar_lea.vmem [#allocation7], %s461
          %463 = dma.done %s459, 32
        $region56: #{tpu_custom_call.1} parent=51 // pred_fallthru
          _
        // Predicated region
        $region57: #{tpu_custom_call.1} parent=51 // pred_check
          %p464 = pneg %p145
        $region58: #{tpu_custom_call.1} parent=51 // pred_check_branch
          %466 = sbr.rel (%p464) target = $region60
        $region59: #{tpu_custom_call.1} parent=51 // pred_region
          %s467 = sand.u32 %s130, 1
          %s468 = scalar_lea.sflag [#allocation9], %s467
          %s469 = sand.u32 %s130, 1
          %s470 = smul.addr %s469, 2
          %s471 = scalar_lea.vmem [#allocation8], %s470
          %472 = dma.done %s468, 32
        $region60: #{tpu_custom_call.1} parent=51 // pred_fallthru
          _
      $region52: #{tpu_custom_call.1} parent=5 // pred_fallthru
        _
    $region6: #{tpu_custom_call.1} parent=1 // loop_footer
      %s26 = sadd.s32 1, %s22
    $region7: #{tpu_custom_call.1} parent=1 // loop_footer_branch
      %21 = sbr.rel target = $region3
    $region8: #{tpu_custom_call.1} parent=1 // loop_exit
      _
    %473 = vsyncpa [#allocation3], 1
    %s474 = scalar_lea.sflag [#allocation3], 1
    %475 = vsyncpa %s474, 1
    %476 = vsyncpa [#allocation6], 1
    %s477 = scalar_lea.sflag [#allocation6], 1
    %478 = vsyncpa %s477, 1
    %479 = vsyncpa [#allocation4], 1
    %s480 = scalar_lea.sflag [#allocation4], 1
    %481 = vsyncpa %s480, 1
    %482 = vsyncpa [#allocation9], 1
    %s483 = scalar_lea.sflag [#allocation9], 1
    %484 = vsyncpa %s483, 1

</llo_original>
